<compile_context>
chip_gen: v7x
topology: tpu7x:2x2x1
jax: 0.10.0
libtpu: 0.0.40
codegen_flags: <defaults>
</compile_context>

<pallas_src>
import functools

import jax
import jax.numpy as jnp
from jax.experimental import pallas as pl
from jax.experimental.pallas import tpu as pltpu

_LANE = 128
_SUBLANE = 8


def _round_up(x, m):
    return ((x + m - 1) // m) * m


def _focal_loss_kernel(logits_ref, targets_ref, out_ref, *,
                       alpha_general, alpha_n1, gamma, n_rows, tile_r):
    # logits_ref : (C, tile_r, 128) native dtype (classes on the leading axis)
    # targets_ref: (tile_r, 128) int32
    # out_ref    : (1, 1, 1) f32 per-tile partial sum (reduced in the wrapper)
    i = pl.program_id(0)

    logits = logits_ref[...].astype(jnp.float32)             # (C, T, 128)
    tgt = targets_ref[...]                                    # (T, 128)
    c, t, l = logits.shape

    # Valid-row mask: host zero-pad (N -> multiple of 128) and Pallas boundary
    # padding of the last grid block both contribute exactly 0.
    r_iota = jax.lax.broadcasted_iota(jnp.int32, (t, l), 0)
    l_iota = jax.lax.broadcasted_iota(jnp.int32, (t, l), 1)
    row = (i * tile_r + r_iota) * l + l_iota
    valid = row < n_rows

    # log-softmax pieces over the class (leading) axis -- dense VPU maxes/adds.
    m = jnp.max(logits, axis=0, keepdims=True)                # (1, T, 128)
    shifted = logits - m                                      # (C, T, 128)
    exp_shifted = jnp.exp(shifted)
    sum_exp = jnp.sum(exp_shifted, axis=0)                    # (T, 128), >= 1

    # One-hot gather of the target class (2-D+ iota is required on TPU).
    class_ids = jax.lax.broadcasted_iota(jnp.int32, (c, t, l), 0)
    onehot = class_ids == tgt[None, :, :]
    shifted_t = jnp.sum(jnp.where(onehot, shifted, 0.0), axis=0)   # (T, 128)
    exp_t = jnp.sum(jnp.where(onehot, exp_shifted, 0.0), axis=0)   # (T, 128)

    # nll = -log_softmax[target]; pt = clamp(softmax[target]) (reuses exp_t,
    # saving an extra exp per row versus exp(-nll)).
    nll = jnp.log(sum_exp) - shifted_t
    pt = jnp.clip(exp_t / sum_exp, 1e-7, 1.0 - 1e-7)

    n1 = (tgt == 1).astype(jnp.float32)
    n3 = (tgt == 3).astype(jnp.float32)
    rem = (tgt == 4).astype(jnp.float32)
    alpha = (alpha_general * (1.0 - n1 - n3 - rem)
             + alpha_n1 * n1 + 0.5 * n3 + 0.45 * rem)

    one_m_pt = 1.0 - pt
    if gamma == 2.5:
        # (1-pt)^2.5 = (1-pt)^2 * sqrt(1-pt): two VPU muls + one EUP sqrt.
        pow_term = one_m_pt * one_m_pt * jnp.sqrt(one_m_pt)
    elif gamma == 2.0:
        pow_term = one_m_pt * one_m_pt
    else:
        pow_term = jnp.power(one_m_pt, jnp.float32(gamma))

    focal = jnp.where(valid, alpha * pow_term * nll, 0.0)     # (T, 128)

    # Per-tile partial: VPU sublane reduce, then one small cross-lane reduce.
    psub = jnp.sum(focal, axis=0, keepdims=True)              # (1, 128)
    total = jnp.sum(psub, axis=1, keepdims=True)              # (1, 1)
    out_ref[...] = total[None]                                # (1, 1, 1)


def focal_loss(inputs, targets, *, alpha_general=0.25, alpha_n1=0.9, gamma=2.5,
               tile_n=131072):
    """inputs: (B, S, C) float logits; targets: (B, S) int class ids."""
    B, S, C = inputs.shape
    N = B * S

    # Rows padded only to a multiple of 128 (lane tile), then viewed as
    # (C, R, 128).  Classes stay un-padded.
    R = _round_up(N, _LANE) // _LANE
    n_pad = R * _LANE

    # Rows-per-tile: tile_n lanes -> tile_r = tile_n/128 sublane-rows, rounded
    # to the sublane tile (8), clamped to the full extent R.
    tile_r = max(1, _round_up(max(tile_n, _LANE) // _LANE, _SUBLANE))
    tile_r = min(tile_r, R)
    num_tiles = (R + tile_r - 1) // tile_r

    # Single host-side relayout, kept in the native dtype (kernel upcasts to
    # f32 in VMEM, so bf16 logits pass through at half the HBM traffic).
    # TODO(synk): emit logits in (C, N) layout upstream to drop this transpose.
    logits_t = jnp.swapaxes(inputs.reshape(N, C), 0, 1)       # (C, N)
    logits_t = jnp.pad(logits_t, ((0, 0), (0, n_pad - N)))    # zero row pad
    logits_3d = logits_t.reshape(C, R, _LANE)
    tgt = jnp.pad(targets.reshape(-1).astype(jnp.int32), (0, n_pad - N))
    tgt = tgt.reshape(R, _LANE)

    kernel = functools.partial(
        _focal_loss_kernel,
        alpha_general=float(alpha_general),
        alpha_n1=float(alpha_n1),
        gamma=float(gamma),
        n_rows=N,
        tile_r=tile_r,
    )

    partials = pl.pallas_call(
        kernel,
        out_shape=jax.ShapeDtypeStruct((num_tiles, 1, 1), jnp.float32),
        grid=(num_tiles,),
        in_specs=[
            pl.BlockSpec((C, tile_r, _LANE), lambda i: (0, i, 0)),
            pl.BlockSpec((tile_r, _LANE), lambda i: (i, 0)),
        ],
        out_specs=pl.BlockSpec((1, 1, 1), lambda i: (i, 0, 0)),
        compiler_params=pltpu.CompilerParams(
            dimension_semantics=("parallel",),
            vmem_limit_bytes=64 * 1024 * 1024),
    )(logits_3d, tgt)

    return jnp.sum(partials) / jnp.float32(N)


def _focal_loss_ref(inputs, targets, alpha_general=0.25, alpha_n1=0.9, gamma=2.5):
    B, S, C = inputs.shape
    logits = inputs.reshape(-1, C).astype(jnp.float32)
    t = targets.reshape(-1)
    log_probs = jax.nn.log_softmax(logits, axis=1)
    probs = jnp.clip(jnp.exp(log_probs), 1e-7, 1 - 1e-7)
    nll = -jnp.take_along_axis(log_probs, t[:, None], axis=1)[:, 0]
    pt = jnp.take_along_axis(probs, t[:, None], axis=1)[:, 0]
    n1 = (t == 1).astype(jnp.float32)
    n3 = (t == 3).astype(jnp.float32)
    rem = (t == 4).astype(jnp.float32)
    alpha = alpha_general * (1 - n1 - n3 - rem) + alpha_n1 * n1 + 0.5 * n3 + 0.45 * rem
    return jnp.mean(alpha * (1 - pt) ** gamma * nll)


if __name__ == "__main__":
    key = jax.random.PRNGKey(0)
    k1, k2, k3, k4 = jax.random.split(key, 4)

    # Small shape matching the module (batch, seq, 5 sleep stages).
    B, S, C = 2, 8, 5
    inputs = jax.random.normal(k1, (B, S, C), dtype=jnp.float32)
    targets = jax.random.randint(k2, (B, S), 0, C, dtype=jnp.int32)
    loss = focal_loss(inputs, targets)
    jax.block_until_ready(loss)
    ref = _focal_loss_ref(inputs, targets)
    assert jnp.allclose(loss, ref, rtol=1e-5, atol=1e-6), (loss, ref)

    # Ragged, multi-tile case: exercises the row mask and parallel partials.
    B2, S2 = 4, 300   # N = 1200 rows, tile_n=1024 -> 2 tiles, ragged tail
    inputs2 = jax.random.normal(k3, (B2, S2, C), dtype=jnp.float32)
    targets2 = jax.random.randint(k4, (B2, S2), 0, C, dtype=jnp.int32)
    loss2 = focal_loss(inputs2, targets2, tile_n=1024)
    jax.block_until_ready(loss2)
    ref2 = _focal_loss_ref(inputs2, targets2)
    assert jnp.allclose(loss2, ref2, rtol=1e-5, atol=1e-6), (loss2, ref2)

    print("KERNEL_OK")
</pallas_src>

<mosaic_0001>
module attributes {stable_mosaic.version = 11 : i64} {
  func.func @_focal_loss_kernel(%arg0: i32, %arg1: memref<5x1x128xf32, #tpu.memory_space<vmem>>, %arg2: memref<1x128xi32, #tpu.memory_space<vmem>>, %arg3: memref<1x1x1xf32, #tpu.memory_space<vmem>>) attributes {dimension_semantics = [#tpu.dimension_semantics<parallel>], iteration_bounds = array<i64: 1>, scalar_prefetch = 0 : i64, scratch_operands = 0 : i64, tpu.core_type = #tpu.core_type<tc>, window_params = [{transform_indices = @transform_0, window_bounds = array<i64: 5, 1, 128>}, {transform_indices = @transform_1, window_bounds = array<i64: 1, 128>}, {transform_indices = @transform_2, window_bounds = array<i64: 1, 1, 1>}]} {
    %c0 = arith.constant 0 : index
    %c0_0 = arith.constant 0 : index
    %c0_1 = arith.constant 0 : index
    %0 = vector.load %arg1[%c0, %c0_0, %c0_1] : memref<5x1x128xf32, #tpu.memory_space<vmem>>, vector<5x1x128xf32>
    %c0_2 = arith.constant 0 : index
    %c0_3 = arith.constant 0 : index
    %1 = vector.load %arg2[%c0_2, %c0_3] : memref<1x128xi32, #tpu.memory_space<vmem>>, vector<1x128xi32>
    %2 = tpu.iota {dimensions = array<i32: 0>} : vector<1x128xi32>
    %3 = tpu.iota {dimensions = array<i32: 1>} : vector<1x128xi32>
    %c1_i32 = arith.constant 1 : i32
    %4 = arith.muli %arg0, %c1_i32 : i32
    %5 = vector.broadcast %4 : i32 to vector<1x128xi32>
    %6 = arith.addi %5, %2 : vector<1x128xi32>
    %c128_i32 = arith.constant 128 : i32
    %7 = vector.broadcast %c128_i32 : i32 to vector<1x128xi32>
    %8 = arith.muli %6, %7 : vector<1x128xi32>
    %9 = arith.addi %8, %3 : vector<1x128xi32>
    %c16_i32 = arith.constant 16 : i32
    %10 = vector.broadcast %c16_i32 : i32 to vector<1x128xi32>
    %11 = arith.cmpi slt, %9, %10 : vector<1x128xi32>
    %cst = arith.constant dense<0xFF800000> : vector<1x128xf32>
    %12 = vector.multi_reduction <maximumf>, %0, %cst [0] : vector<5x1x128xf32> to vector<1x128xf32>
    %13 = vector.shape_cast %12 : vector<1x128xf32> to vector<1x1x128xf32>
    %14 = vector.broadcast %13 : vector<1x1x128xf32> to vector<5x1x128xf32>
    %15 = arith.subf %0, %14 : vector<5x1x128xf32>
    %16 = math.exp %15 : vector<5x1x128xf32>
    %cst_4 = arith.constant dense<0.000000e+00> : vector<1x128xf32>
    %17 = vector.multi_reduction <add>, %16, %cst_4 [0] : vector<5x1x128xf32> to vector<1x128xf32>
    %18 = tpu.iota {dimensions = array<i32: 0>} : vector<5x1x128xi32>
    %19 = vector.shape_cast %1 : vector<1x128xi32> to vector<1x1x128xi32>
    %20 = vector.broadcast %19 : vector<1x1x128xi32> to vector<5x1x128xi32>
    %21 = arith.cmpi eq, %18, %20 : vector<5x1x128xi32>
    %cst_5 = arith.constant 0.000000e+00 : f32
    %22 = vector.broadcast %cst_5 : f32 to vector<5x1x128xf32>
    %23 = arith.select %21, %15, %22 : vector<5x1x128xi1>, vector<5x1x128xf32>
    %cst_6 = arith.constant dense<0.000000e+00> : vector<1x128xf32>
    %24 = vector.multi_reduction <add>, %23, %cst_6 [0] : vector<5x1x128xf32> to vector<1x128xf32>
    %cst_7 = arith.constant 0.000000e+00 : f32
    %25 = vector.broadcast %cst_7 : f32 to vector<5x1x128xf32>
    %26 = arith.select %21, %16, %25 : vector<5x1x128xi1>, vector<5x1x128xf32>
    %cst_8 = arith.constant dense<0.000000e+00> : vector<1x128xf32>
    %27 = vector.multi_reduction <add>, %26, %cst_8 [0] : vector<5x1x128xf32> to vector<1x128xf32>
    %28 = math.log %17 : vector<1x128xf32>
    %29 = arith.subf %28, %24 : vector<1x128xf32>
    %30 = arith.divf %27, %17 : vector<1x128xf32>
    %cst_9 = arith.constant 1.000000e-07 : f32
    %cst_10 = arith.constant 0.99999988 : f32
    %31 = vector.broadcast %cst_9 : f32 to vector<1x128xf32>
    %32 = arith.maximumf %31, %30 : vector<1x128xf32>
    %33 = vector.broadcast %cst_10 : f32 to vector<1x128xf32>
    %34 = arith.minimumf %33, %32 : vector<1x128xf32>
    %c1_i32_11 = arith.constant 1 : i32
    %35 = vector.broadcast %c1_i32_11 : i32 to vector<1x128xi32>
    %36 = arith.cmpi eq, %1, %35 : vector<1x128xi32>
    %37 = arith.extui %36 : vector<1x128xi1> to vector<1x128xi32>
    %38 = arith.sitofp %37 : vector<1x128xi32> to vector<1x128xf32>
    %c3_i32 = arith.constant 3 : i32
    %39 = vector.broadcast %c3_i32 : i32 to vector<1x128xi32>
    %40 = arith.cmpi eq, %1, %39 : vector<1x128xi32>
    %41 = arith.extui %40 : vector<1x128xi1> to vector<1x128xi32>
    %42 = arith.sitofp %41 : vector<1x128xi32> to vector<1x128xf32>
    %c4_i32 = arith.constant 4 : i32
    %43 = vector.broadcast %c4_i32 : i32 to vector<1x128xi32>
    %44 = arith.cmpi eq, %1, %43 : vector<1x128xi32>
    %45 = arith.extui %44 : vector<1x128xi1> to vector<1x128xi32>
    %46 = arith.sitofp %45 : vector<1x128xi32> to vector<1x128xf32>
    %cst_12 = arith.constant 1.000000e+00 : f32
    %47 = vector.broadcast %cst_12 : f32 to vector<1x128xf32>
    %48 = arith.subf %47, %38 : vector<1x128xf32>
    %49 = arith.subf %48, %42 : vector<1x128xf32>
    %50 = arith.subf %49, %46 : vector<1x128xf32>
    %cst_13 = arith.constant 2.500000e-01 : f32
    %51 = vector.broadcast %cst_13 : f32 to vector<1x128xf32>
    %52 = arith.mulf %51, %50 : vector<1x128xf32>
    %cst_14 = arith.constant 0.899999976 : f32
    %53 = vector.broadcast %cst_14 : f32 to vector<1x128xf32>
    %54 = arith.mulf %53, %38 : vector<1x128xf32>
    %55 = arith.addf %52, %54 : vector<1x128xf32>
    %cst_15 = arith.constant 5.000000e-01 : f32
    %56 = vector.broadcast %cst_15 : f32 to vector<1x128xf32>
    %57 = arith.mulf %56, %42 : vector<1x128xf32>
    %58 = arith.addf %55, %57 : vector<1x128xf32>
    %cst_16 = arith.constant 4.500000e-01 : f32
    %59 = vector.broadcast %cst_16 : f32 to vector<1x128xf32>
    %60 = arith.mulf %59, %46 : vector<1x128xf32>
    %61 = arith.addf %58, %60 : vector<1x128xf32>
    %cst_17 = arith.constant 1.000000e+00 : f32
    %62 = vector.broadcast %cst_17 : f32 to vector<1x128xf32>
    %63 = arith.subf %62, %34 : vector<1x128xf32>
    %64 = arith.mulf %63, %63 : vector<1x128xf32>
    %65 = math.sqrt %63 : vector<1x128xf32>
    %66 = arith.mulf %64, %65 : vector<1x128xf32>
    %67 = arith.mulf %61, %66 : vector<1x128xf32>
    %68 = arith.mulf %67, %29 : vector<1x128xf32>
    %cst_18 = arith.constant 0.000000e+00 : f32
    %69 = vector.broadcast %cst_18 : f32 to vector<1x128xf32>
    %70 = arith.select %11, %68, %69 : vector<1x128xi1>, vector<1x128xf32>
    %cst_19 = arith.constant dense<0.000000e+00> : vector<128xf32>
    %71 = vector.multi_reduction <add>, %70, %cst_19 [0] : vector<1x128xf32> to vector<128xf32>
    %72 = vector.shape_cast %71 : vector<128xf32> to vector<1x128xf32>
    %cst_20 = arith.constant dense<0.000000e+00> : vector<1xf32>
    %73 = vector.multi_reduction <add>, %72, %cst_20 [1] : vector<1x128xf32> to vector<1xf32>
    %74 = vector.shape_cast %73 : vector<1xf32> to vector<1x1xf32>
    %75 = vector.shape_cast %74 : vector<1x1xf32> to vector<1x1x1xf32>
    %c0_21 = arith.constant 0 : index
    %c0_22 = arith.constant 0 : index
    %c0_23 = arith.constant 0 : index
    %76 = vector.load %arg3[%c0_21, %c0_22, %c0_23] : memref<1x1x1xf32, #tpu.memory_space<vmem>>, vector<1x1x1xf32>
    tpu.vector_store %arg3[%c0_21, %c0_22, %c0_23], %75 {strides = array<i32>} : memref<1x1x1xf32, #tpu.memory_space<vmem>>, vector<1x1x1xf32>,
    return
  }
  func.func @transform_0(%arg0: i32) -> (i32, i32, i32) {
    %c0_i32 = arith.constant 0 : i32
    %c0_i32_0 = arith.constant 0 : i32
    %c0_i32_1 = arith.constant 0 : i32
    return %c0_i32, %arg0, %c0_i32_0 : i32, i32, i32
  }
  func.func @transform_1(%arg0: i32) -> (i32, i32) {
    %c0_i32 = arith.constant 0 : i32
    %c0_i32_0 = arith.constant 0 : i32
    return %arg0, %c0_i32 : i32, i32
  }
  func.func @transform_2(%arg0: i32) -> (i32, i32, i32) {
    %c0_i32 = arith.constant 0 : i32
    %c0_i32_0 = arith.constant 0 : i32
    %c0_i32_1 = arith.constant 0 : i32
    return %arg0, %c0_i32, %c0_i32_0 : i32, i32, i32
  }
}

</mosaic_0001>

<llo_original>
// kernel: tpu_custom_call.1
$region0: #{tpu_custom_call.1}
  #allocation0 [shape = 'u32[]', space=smem, size = 0x4, offset = 0x4, fixed_abs, tag = 'smem constant byte address 0x4 - core index']
  #allocation1 [shape = 'u32[144,128]{1,0:T(1,128)}', space=vmem, size = 0x12000, scoped, tag = 'internal scratch']
  %s0 = inlined_call_operand.hbm [shape: f32[5,1,128], index: 0, kind: input, shape index: {}]
  %s1 = inlined_call_operand.hbm [shape: s32[1,128], index: 1, kind: input, shape index: {}]
  %s2 = inlined_call_operand.hbm [shape: f32[1,1,1], index: 2, kind: output, shape index: {}]
  %s3 = sld [smem:[#allocation0]]
  $region26: #{tpu_custom_call.1} parent=0
    _
  %s5 = ssub.s32 1, %s3
  %s6 = scalar_select 0, %s5, %s3
  $region1: #{tpu_custom_call.1} parent=0
    #allocation2 [shape = 'u8[2560]{0}', space=vmem, size = 0xc00, scoped, tag = 'input window, operand 0, single buffered']
    #allocation3 [shape = 's32[1]{0}', space=sflag, size = 0x4, scoped, tag = 'scoped memory for tpu_custom_call.1']
    #allocation4 [shape = 's32[1]{0}', space=sflag, size = 0x4, scoped, tag = 'scoped memory for tpu_custom_call.1']
    #allocation5 [shape = 'u8[512]{0}', space=vmem, size = 0x400, scoped, tag = 'input window, operand 1, single buffered']
    #allocation6 [shape = 's32[1]{0}', space=sflag, size = 0x4, scoped, tag = 'scoped memory for tpu_custom_call.1']
    #allocation7 [shape = 'u8[512]{0}', space=vmem, size = 0x400, scoped, tag = 'output window, operand 0, single buffered']
    %7 = vsyncpa [#allocation3], 0
    %8 = vsyncpa [#allocation6], 0
    %9 = vsyncpa [#allocation4], 0
    // Predicated region
    $region2: #{tpu_custom_call.1} parent=1 // pred_check
      _
    $region3: #{tpu_custom_call.1} parent=1 // pred_check_branch
      %11 = sbr.rel (0) target = $region5
    $region4: #{tpu_custom_call.1} parent=1 // pred_region
      %s13 = ssub.s32 80, 80
      %14 = vsyncadd [#allocation3], %s13
      %s15 = sshll.u32 [#allocation2], 4
      %s16 = int_to_ptr.vmem [resolvable:$true] %s15
      %21 = dma.hbm_to_vmem [thread:$0]  %s0, 80, %s16, [#allocation3], 16, 16, 1
    $region5: #{tpu_custom_call.1} parent=1 // pred_fallthru
      _
    // Predicated region
    $region6: #{tpu_custom_call.1} parent=1 // pred_check
      _
    $region7: #{tpu_custom_call.1} parent=1 // pred_check_branch
      %23 = sbr.rel (0) target = $region9
    $region8: #{tpu_custom_call.1} parent=1 // pred_region
      %s25 = ssub.s32 16, 16
      %26 = vsyncadd [#allocation6], %s25
      %s28 = sshll.u32 [#allocation5], 4
      %s29 = int_to_ptr.vmem [resolvable:$true] %s28
      %31 = dma.hbm_to_vmem [thread:$0]  %s1, 16, %s29, [#allocation6]
    $region9: #{tpu_custom_call.1} parent=1 // pred_fallthru
      _
    // Predicated region
    $region10: #{tpu_custom_call.1} parent=1 // pred_check
      _
    $region11: #{tpu_custom_call.1} parent=1 // pred_check_branch
      %33 = sbr.rel (0) target = $region13
    $region12: #{tpu_custom_call.1} parent=1 // pred_region
      %34 = dma.done [#allocation3], 80
    $region13: #{tpu_custom_call.1} parent=1 // pred_fallthru
      _
    // Predicated region
    $region14: #{tpu_custom_call.1} parent=1 // pred_check
      _
    $region15: #{tpu_custom_call.1} parent=1 // pred_check_branch
      %36 = sbr.rel (0) target = $region17
    $region16: #{tpu_custom_call.1} parent=1 // pred_region
      %37 = dma.done [#allocation6], 16
    $region17: #{tpu_custom_call.1} parent=1 // pred_fallthru
      _
    %v38 = vld [vmem:[#allocation2] sm:$0x1]
    %v39 = vld [vmem:[#allocation2 + $0x1] sm:$0x1]
    %v40 = vld [vmem:[#allocation2 + $0x2] sm:$0x1]
    %v41 = vld [vmem:[#allocation2 + $0x3] sm:$0x1]
    %v42 = vld [vmem:[#allocation2 + $0x4] sm:$0x1]
    %v43 = vld [vmem:[#allocation5] sm:$0x1]
    %v44 = vlaneseq
    %v45 = vshrl.u32 %v44, 7
    %v46 = vlaneseq
    %v47 = vand.u32 %v46, 127
    %v48 = vstv 0
    %v49 = vadd.s32 %v48, %v45
    %v50 = vmul.u32 %v49, 128
    %v51 = vadd.s32 %v50, %v47
    %vm52 = vcmp.lt.s32.totalorder %v51, 16
    %v53 = vlaneseq
    %vm54 = vcmp.ge.s32.totalorder %v53, 0
    %vm55 = vcmp.lt.s32.totalorder %v53, 128
    %vm56 = vmand %vm54, %vm55
    %v57 = vsel %vm56, %v38, -inf
    %v58 = vsel %vm56, %v39, -inf
    %v59 = vsel %vm56, %v40, -inf
    %v60 = vsel %vm56, %v41, -inf
    %v61 = vsel %vm56, %v42, -inf
    %v62 = vmax.f32 %v57, %v61
    %v63 = vmax.f32 %v62, %v58
    %v64 = vmax.f32 %v59, %v60
    %v65 = vmax.f32 %v63, %v64
    %v66 = vsub.f32 %v38, %v65
    %v67 = vsub.f32 %v39, %v65
    %v68 = vsub.f32 %v40, %v65
    %v69 = vsub.f32 %v41, %v65
    %v70 = vsub.f32 %v42, %v65
    %v71 = vmul.f32 %v66, 1.442695
    %v72 = vpow.pop %v71
    %v73 = vmul.f32 %v67, 1.442695
    %v74 = vpow.pop %v73
    %v75 = vmul.f32 %v68, 1.442695
    %v76 = vpow.pop %v75
    %v77 = vmul.f32 %v69, 1.442695
    %v78 = vpow.pop %v77
    %v79 = vmul.f32 %v70, 1.442695
    %v80 = vpow.pop %v79
    %vm81 = vcmask 1040384
    %v82 = vsel %vm81, %v72, 0.0
    %v83 = vsel %vm81, %v74, 0.0
    %v84 = vadd.f32 %v82, %v83
    %v85 = vsel %vm81, %v76, 0.0
    %v86 = vadd.f32 %v84, %v85
    %v87 = vsel %vm81, %v78, 0.0
    %v88 = vadd.f32 %v86, %v87
    %v89 = vsel %vm81, %v80, 0.0
    %v90 = vadd.f32 %v88, %v89
    %vm91 = vcmp.eq.s32.totalorder %v43, 0
    %vm92 = vcmp.eq.s32.totalorder %v43, 1
    %vm93 = vcmp.eq.s32.totalorder %v43, 2
    %vm94 = vcmp.eq.s32.totalorder %v43, 3
    %vm95 = vcmp.eq.s32.totalorder %v43, 4
    %v96 = vsel %vm91, %v66, 0.0
    %v97 = vsel %vm92, %v67, 0.0
    %v98 = vsel %vm93, %v68, 0.0
    %v99 = vsel %vm94, %v69, 0.0
    %v100 = vsel %vm95, %v70, 0.0
    %v101 = vsel %vm81, %v96, 0.0
    %v102 = vsel %vm81, %v97, 0.0
    %v103 = vadd.f32 %v101, %v102
    %v104 = vsel %vm81, %v98, 0.0
    %v105 = vadd.f32 %v103, %v104
    %v106 = vsel %vm81, %v99, 0.0
    %v107 = vadd.f32 %v105, %v106
    %v108 = vsel %vm81, %v100, 0.0
    %v109 = vadd.f32 %v107, %v108
    %v110 = vsel %vm91, %v72, 0.0
    %v111 = vsel %vm92, %v74, 0.0
    %v112 = vsel %vm93, %v76, 0.0
    %v113 = vsel %vm94, %v78, 0.0
    %v114 = vsel %vm95, %v80, 0.0
    %v115 = vsel %vm81, %v110, 0.0
    %v116 = vsel %vm81, %v111, 0.0
    %v117 = vadd.f32 %v115, %v116
    %v118 = vsel %vm81, %v112, 0.0
    %v119 = vadd.f32 %v117, %v118
    %v120 = vsel %vm81, %v113, 0.0
    %v121 = vadd.f32 %v119, %v120
    %v122 = vsel %vm81, %v114, 0.0
    %v123 = vadd.f32 %v121, %v122
    %v124 = vlog2.pop %v90
    %v125 = vmul.f32 %v124, 0.6931472
    %v126 = vsub.f32 %v125, %v109
    %v127 = vrcp.pop %v90
    %v128 = vmul.f32 %v123, %v127
    %v129 = vmax.f32 %v128, 1e-07
    %v130 = vmin.f32 %v129, 0.9999999
    %v131 = vsel %vm92, 1, 0
    %v132 = vcvt.s32.f32 %v131
    %v133 = vsel %vm94, 1, 0
    %v134 = vcvt.s32.f32 %v133
    %v135 = vsel %vm95, 1, 0
    %v136 = vcvt.s32.f32 %v135
    %v137 = vsub.f32 1.0, %v132
    %v138 = vsub.f32 %v137, %v134
    %v139 = vsub.f32 %v138, %v136
    %v140 = vmul.f32 %v139, 0.25
    %v141 = vmul.f32 %v132, 0.9
    %v142 = vadd.f32 %v140, %v141
    %v143 = vmul.f32 %v134, 0.5
    %v144 = vadd.f32 %v142, %v143
    %v145 = vmul.f32 %v136, 0.45
    %v146 = vadd.f32 %v144, %v145
    %v147 = vsub.f32 1.0, %v130
    %v148 = vmul.f32 %v147, %v147
    %v149 = vrsqrt.pop %v147
    %v150 = vmul.f32 %v147, %v149
    %vm151 = vcmp.eq.f32.partialorder %v147, inf
    %v152 = vsel %vm151, %v147, %v150
    %vm153 = vcmp.eq.f32.partialorder %v147, 0.0
    %v154 = vand.u32 %v147, 2147483648
    %v155 = vsel %vm153, %v154, %v152
    %v156 = vmul.f32 %v148, %v155
    %v157 = vmul.f32 %v146, %v156
    %v158 = vmul.f32 %v157, %v126
    %v159 = vsel %vm52, %v158, 0.0
    %v160 = vadd.f32 %v159, 0.0
    %v161 = vsel %vm81, %v160, 0.0
    %162 = vadd.xlane.f32.xlu0 %v161
    %v163 = vpop.xlane.xlu0 %162
    %vm164 = vcmask 0
    %165 = vst.msk [vmem:[#allocation7] sm:$0x1] %vm164, %v163
    // Predicated region
    $region18: #{tpu_custom_call.1} parent=1 // pred_check
      _
    $region19: #{tpu_custom_call.1} parent=1 // pred_check_branch
      %167 = sbr.rel (0) target = $region21
    $region20: #{tpu_custom_call.1} parent=1 // pred_region
      %s169 = ssub.s32 16, 16
      %170 = vsyncadd [#allocation4], %s169
      %s172 = sshll.u32 [#allocation7], 4
      %s173 = int_to_ptr.vmem [resolvable:$true] %s172
      %175 = dma.vmem_to_hbm [thread:$0]  %s173, 16, %s2, [#allocation4]
    $region21: #{tpu_custom_call.1} parent=1 // pred_fallthru
      _
    // Predicated region
    $region22: #{tpu_custom_call.1} parent=1 // pred_check
      _
    $region23: #{tpu_custom_call.1} parent=1 // pred_check_branch
      %177 = sbr.rel (0) target = $region25
    $region24: #{tpu_custom_call.1} parent=1 // pred_region
      %178 = dma.done [#allocation4], 16
    $region25: #{tpu_custom_call.1} parent=1 // pred_fallthru
      _
    %179 = vsyncpa [#allocation3], 1
    %180 = vsyncpa [#allocation6], 1
    %181 = vsyncpa [#allocation4], 1

</llo_original>
